<compile_context>
chip_gen: v7x
topology: tpu7x:2x2x1
jax: 0.10.0
libtpu: 0.0.40
codegen_flags: <defaults>
</compile_context>

<pallas_src>
import jax
import jax.numpy as jnp
from jax.experimental import pallas as pl
from jax.experimental.pallas import tpu as pltpu


D = 4              # state dimension
H = 32             # hidden neurons (small-shape config per harness guidance)
NLAYERS = 3        # residual layers
LANE = 128         # TPU lane width
TILE_N_MAX = 2048  # rows per grid step


def _round_up(x, m):
    return (x + m - 1) // m * m


def network_kernel(y0_ref, t_ref,
                   lw_y_ref, lw_t_ref, lb_ref,
                   w0_ref, b0_ref, w1_ref, b1_ref, w2_ref, b2_ref,
                   pw_ref, pb_ref,
                   out_ref):
    y0 = y0_ref[...]          # (D, TN)  feature-major, batch in lanes
    t = t_ref[...]            # (1, TN)

    lw_y = lw_y_ref[...]      # (H, D)
    lw_t = lw_t_ref[...]      # (H, 1)
    lb = lb_ref[...]          # (H, 1)
    ws = (w0_ref[...], w1_ref[...], w2_ref[...])   # each (H, H)
    bs = (b0_ref[...], b1_ref[...], b2_ref[...])   # each (H, 1)
    pw = pw_ref[...]          # (D, H)
    pb = pb_ref[...]          # (D, 1)

    # Shared lift term, computed once and reused by both parametric passes
    # (the t0 pass needs no zero matmul: tanh(base) is exactly its lift).
    base = jnp.dot(lw_y, y0, preferred_element_type=jnp.float32) + lb   # (H, TN)

    def trunk(h):
        # residual stack + projection, all on (H, TN) lane-dense activations
        for w, b in zip(ws, bs):
            h = h + jnp.tanh(
                jnp.dot(w, h, preferred_element_type=jnp.float32) + b)
        return jnp.dot(pw, h, preferred_element_type=jnp.float32) + pb  # (D, TN)

    res_t = trunk(jnp.tanh(base + lw_t * t))   # parametric(y0, t)
    res_0 = trunk(jnp.tanh(base))              # parametric(y0, 0)

    out_ref[...] = y0 + (res_t - res_0)


def init_params(key, d=D, h=H, nlayers=NLAYERS, dtype=jnp.float32):
    """PyTorch-style Linear params: W (out, in), b (out, 1), U(-1/sqrt(fan_in), +)."""
    keys = jax.random.split(key, 2 * (nlayers + 2))
    ki = iter(keys)

    def linear(in_f, out_f):
        bound = float(in_f) ** -0.5
        w = jax.random.uniform(next(ki), (out_f, in_f), dtype, -bound, bound)
        b = jax.random.uniform(next(ki), (out_f, 1), dtype, -bound, bound)
        return w, b

    params = {
        "lift": linear(d + 1, h),
        "linears": [linear(h, h) for _ in range(nlayers)],
        "proj": linear(h, d),
    }
    return params


def network_forward(y0, t, params):
    y0 = y0.reshape(-1, D).astype(jnp.float32)
    t = t.reshape(-1, 1).astype(jnp.float32)
    n = y0.shape[0]

    # pad batch up to a lane-aligned multiple of the tile
    n_lane = _round_up(max(n, 1), LANE)
    tile_n = min(TILE_N_MAX, n_lane)
    n_pad = _round_up(n_lane, tile_n)
    grid = (n_pad // tile_n,)

    # feature-major (batch in lanes), zero-padded tail columns
    y0_T = jnp.zeros((D, n_pad), jnp.float32).at[:, :n].set(y0.T)
    t_T = jnp.zeros((1, n_pad), jnp.float32).at[:, :n].set(t.T)

    # split lift weight in the wrapper (free layout plumbing, no in-kernel slice)
    lw, lb = params["lift"]                 # (H, D+1), (H, 1)
    lw_y = lw[:, :D]                        # (H, D)
    lw_t = lw[:, D:D + 1]                   # (H, 1)
    (w0, b0), (w1, b1), (w2, b2) = params["linears"]
    pw, pb = params["proj"]

    args = (y0_T, t_T, lw_y, lw_t, lb, w0, b0, w1, b1, w2, b2, pw, pb)

    def tile_spec(rows):
        return pl.BlockSpec((rows, tile_n), lambda i: (0, i))

    def resident(a):
        # constant index_map -> block never changes, stays VMEM-resident
        return pl.BlockSpec(a.shape, lambda i: (0, 0))

    in_specs = [tile_spec(D), tile_spec(1)] + [resident(a) for a in args[2:]]
    out_spec = tile_spec(D)

    # advisory cost estimate for the XLA scheduler
    flops = n_pad * (
        2 * D * H + 2 * H                                       # lift (y-part + t-part)
        + 2 * (NLAYERS * (2 * H * H + 2 * H) + 2 * H * D + D)   # two trunk passes
        + 3 * D                                                 # final update
    )
    transcendentals = n_pad * 2 * (NLAYERS + 1) * H
    weight_bytes = 4 * (H * (D + 1) + H + NLAYERS * (H * H + H) + D * H + D)
    bytes_accessed = 4 * n_pad * (2 * D + 1) + weight_bytes

    out_T = pl.pallas_call(
        network_kernel,
        out_shape=jax.ShapeDtypeStruct((D, n_pad), jnp.float32),
        grid=grid,
        in_specs=in_specs,
        out_specs=out_spec,
        compiler_params=pltpu.CompilerParams(
            dimension_semantics=("parallel",)),
        cost_estimate=pl.CostEstimate(
            flops=flops,
            transcendentals=transcendentals,
            bytes_accessed=bytes_accessed),
    )(*args)

    return out_T[:, :n].T                                   # (n, D)


def network_forward_ref(y0, t, params):
    """Pure-JAX reference (batch-major, PyTorch-style weights) for checking."""
    y0 = y0.reshape(-1, D).astype(jnp.float32)
    t = t.reshape(-1, 1).astype(jnp.float32)

    def parametric(tt):
        x = jnp.concatenate([y0, tt], axis=1)
        w, b = params["lift"]
        h = jnp.tanh(x @ w.T + b.T)
        for w, b in params["linears"]:
            h = h + jnp.tanh(h @ w.T + b.T)
        w, b = params["proj"]
        return h @ w.T + b.T

    return y0 + parametric(t) - parametric(jnp.zeros_like(t))


if __name__ == "__main__":
    key = jax.random.PRNGKey(0)
    k_params, k_y0, k_t = jax.random.split(key, 3)

    params = init_params(k_params)

    N = 8
    y0 = jax.random.normal(k_y0, (N, D), jnp.float32)
    t = jax.random.uniform(k_t, (N,), jnp.float32)

    out = network_forward(y0, t, params)
    out = jax.block_until_ready(out)

    ref = network_forward_ref(y0, t, params)
    assert out.shape == (N, D)
    assert jnp.allclose(out, ref, atol=1e-4, rtol=1e-4), "mismatch vs reference"

    print("KERNEL_OK")
</pallas_src>

<mosaic_0001>
module attributes {stable_mosaic.version = 11 : i64} {
  func.func @network_kernel(%arg0: i32, %arg1: memref<4x128xf32, #tpu.memory_space<vmem>>, %arg2: memref<1x128xf32, #tpu.memory_space<vmem>>, %arg3: memref<32x4xf32, #tpu.memory_space<vmem>>, %arg4: memref<32x1xf32, #tpu.memory_space<vmem>>, %arg5: memref<32x1xf32, #tpu.memory_space<vmem>>, %arg6: memref<32x32xf32, #tpu.memory_space<vmem>>, %arg7: memref<32x1xf32, #tpu.memory_space<vmem>>, %arg8: memref<32x32xf32, #tpu.memory_space<vmem>>, %arg9: memref<32x1xf32, #tpu.memory_space<vmem>>, %arg10: memref<32x32xf32, #tpu.memory_space<vmem>>, %arg11: memref<32x1xf32, #tpu.memory_space<vmem>>, %arg12: memref<4x32xf32, #tpu.memory_space<vmem>>, %arg13: memref<4x1xf32, #tpu.memory_space<vmem>>, %arg14: memref<4x128xf32, #tpu.memory_space<vmem>>) attributes {dimension_semantics = [#tpu.dimension_semantics<parallel>], iteration_bounds = array<i64: 1>, scalar_prefetch = 0 : i64, scratch_operands = 0 : i64, tpu.core_type = #tpu.core_type<tc>, window_params = [{transform_indices = @transform_0, window_bounds = array<i64: 4, 128>}, {transform_indices = @transform_1, window_bounds = array<i64: 1, 128>}, {pipeline_mode = #tpu.pipeline_mode<synchronous>, transform_indices = @transform_2, window_bounds = array<i64: 32, 4>}, {pipeline_mode = #tpu.pipeline_mode<synchronous>, transform_indices = @transform_3, window_bounds = array<i64: 32, 1>}, {pipeline_mode = #tpu.pipeline_mode<synchronous>, transform_indices = @transform_4, window_bounds = array<i64: 32, 1>}, {pipeline_mode = #tpu.pipeline_mode<synchronous>, transform_indices = @transform_5, window_bounds = array<i64: 32, 32>}, {pipeline_mode = #tpu.pipeline_mode<synchronous>, transform_indices = @transform_6, window_bounds = array<i64: 32, 1>}, {pipeline_mode = #tpu.pipeline_mode<synchronous>, transform_indices = @transform_7, window_bounds = array<i64: 32, 32>}, {pipeline_mode = #tpu.pipeline_mode<synchronous>, transform_indices = @transform_8, window_bounds = array<i64: 32, 1>}, {pipeline_mode = #tpu.pipeline_mode<synchronous>, transform_indices = @transform_9, window_bounds = array<i64: 32, 32>}, {pipeline_mode = #tpu.pipeline_mode<synchronous>, transform_indices = @transform_10, window_bounds = array<i64: 32, 1>}, {pipeline_mode = #tpu.pipeline_mode<synchronous>, transform_indices = @transform_11, window_bounds = array<i64: 4, 32>}, {pipeline_mode = #tpu.pipeline_mode<synchronous>, transform_indices = @transform_12, window_bounds = array<i64: 4, 1>}, {transform_indices = @transform_13, window_bounds = array<i64: 4, 128>}]} {
    %c0 = arith.constant 0 : index
    %c0_0 = arith.constant 0 : index
    %0 = vector.load %arg1[%c0, %c0_0] : memref<4x128xf32, #tpu.memory_space<vmem>>, vector<4x128xf32>
    %c0_1 = arith.constant 0 : index
    %c0_2 = arith.constant 0 : index
    %1 = vector.load %arg2[%c0_1, %c0_2] : memref<1x128xf32, #tpu.memory_space<vmem>>, vector<1x128xf32>
    %c0_3 = arith.constant 0 : index
    %c0_4 = arith.constant 0 : index
    %2 = vector.load %arg3[%c0_3, %c0_4] : memref<32x4xf32, #tpu.memory_space<vmem>>, vector<32x4xf32>
    %c0_5 = arith.constant 0 : index
    %c0_6 = arith.constant 0 : index
    %3 = vector.load %arg4[%c0_5, %c0_6] : memref<32x1xf32, #tpu.memory_space<vmem>>, vector<32x1xf32>
    %c0_7 = arith.constant 0 : index
    %c0_8 = arith.constant 0 : index
    %4 = vector.load %arg5[%c0_7, %c0_8] : memref<32x1xf32, #tpu.memory_space<vmem>>, vector<32x1xf32>
    %c0_9 = arith.constant 0 : index
    %c0_10 = arith.constant 0 : index
    %5 = vector.load %arg6[%c0_9, %c0_10] : memref<32x32xf32, #tpu.memory_space<vmem>>, vector<32x32xf32>
    %c0_11 = arith.constant 0 : index
    %c0_12 = arith.constant 0 : index
    %6 = vector.load %arg8[%c0_11, %c0_12] : memref<32x32xf32, #tpu.memory_space<vmem>>, vector<32x32xf32>
    %c0_13 = arith.constant 0 : index
    %c0_14 = arith.constant 0 : index
    %7 = vector.load %arg10[%c0_13, %c0_14] : memref<32x32xf32, #tpu.memory_space<vmem>>, vector<32x32xf32>
    %c0_15 = arith.constant 0 : index
    %c0_16 = arith.constant 0 : index
    %8 = vector.load %arg7[%c0_15, %c0_16] : memref<32x1xf32, #tpu.memory_space<vmem>>, vector<32x1xf32>
    %c0_17 = arith.constant 0 : index
    %c0_18 = arith.constant 0 : index
    %9 = vector.load %arg9[%c0_17, %c0_18] : memref<32x1xf32, #tpu.memory_space<vmem>>, vector<32x1xf32>
    %c0_19 = arith.constant 0 : index
    %c0_20 = arith.constant 0 : index
    %10 = vector.load %arg11[%c0_19, %c0_20] : memref<32x1xf32, #tpu.memory_space<vmem>>, vector<32x1xf32>
    %c0_21 = arith.constant 0 : index
    %c0_22 = arith.constant 0 : index
    %11 = vector.load %arg12[%c0_21, %c0_22] : memref<4x32xf32, #tpu.memory_space<vmem>>, vector<4x32xf32>
    %c0_23 = arith.constant 0 : index
    %c0_24 = arith.constant 0 : index
    %12 = vector.load %arg13[%c0_23, %c0_24] : memref<4x1xf32, #tpu.memory_space<vmem>>, vector<4x1xf32>
    %cst = arith.constant dense<0.000000e+00> : vector<32x128xf32>
    %13 = tpu.matmul %2, %0, %cst {dimension_numbers = #tpu.dot_dimension_numbers<[1], [0], [0], [1], [0, 0, 1, 1], [], []>} : vector<32x4xf32>, vector<4x128xf32>, vector<32x128xf32> -> vector<32x128xf32>
    %14 = vector.broadcast %4 : vector<32x1xf32> to vector<32x128xf32>
    %15 = arith.addf %13, %14 : vector<32x128xf32>
    %16 = vector.broadcast %3 : vector<32x1xf32> to vector<32x128xf32>
    %17 = vector.broadcast %1 : vector<1x128xf32> to vector<32x128xf32>
    %18 = arith.mulf %16, %17 : vector<32x128xf32>
    %19 = arith.addf %15, %18 : vector<32x128xf32>
    %20 = math.tanh %19 : vector<32x128xf32>
    %cst_25 = arith.constant dense<0.000000e+00> : vector<32x128xf32>
    %21 = tpu.matmul %5, %20, %cst_25 {dimension_numbers = #tpu.dot_dimension_numbers<[1], [0], [0], [1], [0, 0, 1, 1], [], []>} : vector<32x32xf32>, vector<32x128xf32>, vector<32x128xf32> -> vector<32x128xf32>
    %22 = vector.broadcast %8 : vector<32x1xf32> to vector<32x128xf32>
    %23 = arith.addf %21, %22 : vector<32x128xf32>
    %24 = math.tanh %23 : vector<32x128xf32>
    %25 = arith.addf %20, %24 : vector<32x128xf32>
    %cst_26 = arith.constant dense<0.000000e+00> : vector<32x128xf32>
    %26 = tpu.matmul %6, %25, %cst_26 {dimension_numbers = #tpu.dot_dimension_numbers<[1], [0], [0], [1], [0, 0, 1, 1], [], []>} : vector<32x32xf32>, vector<32x128xf32>, vector<32x128xf32> -> vector<32x128xf32>
    %27 = vector.broadcast %9 : vector<32x1xf32> to vector<32x128xf32>
    %28 = arith.addf %26, %27 : vector<32x128xf32>
    %29 = math.tanh %28 : vector<32x128xf32>
    %30 = arith.addf %25, %29 : vector<32x128xf32>
    %cst_27 = arith.constant dense<0.000000e+00> : vector<32x128xf32>
    %31 = tpu.matmul %7, %30, %cst_27 {dimension_numbers = #tpu.dot_dimension_numbers<[1], [0], [0], [1], [0, 0, 1, 1], [], []>} : vector<32x32xf32>, vector<32x128xf32>, vector<32x128xf32> -> vector<32x128xf32>
    %32 = vector.broadcast %10 : vector<32x1xf32> to vector<32x128xf32>
    %33 = arith.addf %31, %32 : vector<32x128xf32>
    %34 = math.tanh %33 : vector<32x128xf32>
    %35 = arith.addf %30, %34 : vector<32x128xf32>
    %cst_28 = arith.constant dense<0.000000e+00> : vector<4x128xf32>
    %36 = tpu.matmul %11, %35, %cst_28 {dimension_numbers = #tpu.dot_dimension_numbers<[1], [0], [0], [1], [0, 0, 1, 1], [], []>} : vector<4x32xf32>, vector<32x128xf32>, vector<4x128xf32> -> vector<4x128xf32>
    %37 = vector.broadcast %12 : vector<4x1xf32> to vector<4x128xf32>
    %38 = arith.addf %36, %37 : vector<4x128xf32>
    %39 = math.tanh %15 : vector<32x128xf32>
    %cst_29 = arith.constant dense<0.000000e+00> : vector<32x128xf32>
    %40 = tpu.matmul %5, %39, %cst_29 {dimension_numbers = #tpu.dot_dimension_numbers<[1], [0], [0], [1], [0, 0, 1, 1], [], []>} : vector<32x32xf32>, vector<32x128xf32>, vector<32x128xf32> -> vector<32x128xf32>
    %41 = vector.broadcast %8 : vector<32x1xf32> to vector<32x128xf32>
    %42 = arith.addf %40, %41 : vector<32x128xf32>
    %43 = math.tanh %42 : vector<32x128xf32>
    %44 = arith.addf %39, %43 : vector<32x128xf32>
    %cst_30 = arith.constant dense<0.000000e+00> : vector<32x128xf32>
    %45 = tpu.matmul %6, %44, %cst_30 {dimension_numbers = #tpu.dot_dimension_numbers<[1], [0], [0], [1], [0, 0, 1, 1], [], []>} : vector<32x32xf32>, vector<32x128xf32>, vector<32x128xf32> -> vector<32x128xf32>
    %46 = vector.broadcast %9 : vector<32x1xf32> to vector<32x128xf32>
    %47 = arith.addf %45, %46 : vector<32x128xf32>
    %48 = math.tanh %47 : vector<32x128xf32>
    %49 = arith.addf %44, %48 : vector<32x128xf32>
    %cst_31 = arith.constant dense<0.000000e+00> : vector<32x128xf32>
    %50 = tpu.matmul %7, %49, %cst_31 {dimension_numbers = #tpu.dot_dimension_numbers<[1], [0], [0], [1], [0, 0, 1, 1], [], []>} : vector<32x32xf32>, vector<32x128xf32>, vector<32x128xf32> -> vector<32x128xf32>
    %51 = vector.broadcast %10 : vector<32x1xf32> to vector<32x128xf32>
    %52 = arith.addf %50, %51 : vector<32x128xf32>
    %53 = math.tanh %52 : vector<32x128xf32>
    %54 = arith.addf %49, %53 : vector<32x128xf32>
    %cst_32 = arith.constant dense<0.000000e+00> : vector<4x128xf32>
    %55 = tpu.matmul %11, %54, %cst_32 {dimension_numbers = #tpu.dot_dimension_numbers<[1], [0], [0], [1], [0, 0, 1, 1], [], []>} : vector<4x32xf32>, vector<32x128xf32>, vector<4x128xf32> -> vector<4x128xf32>
    %56 = vector.broadcast %12 : vector<4x1xf32> to vector<4x128xf32>
    %57 = arith.addf %55, %56 : vector<4x128xf32>
    %58 = arith.subf %38, %57 : vector<4x128xf32>
    %59 = arith.addf %0, %58 : vector<4x128xf32>
    %c0_33 = arith.constant 0 : index
    %c0_34 = arith.constant 0 : index
    %60 = vector.load %arg14[%c0_33, %c0_34] : memref<4x128xf32, #tpu.memory_space<vmem>>, vector<4x128xf32>
    tpu.vector_store %arg14[%c0_33, %c0_34], %59 {strides = array<i32>} : memref<4x128xf32, #tpu.memory_space<vmem>>, vector<4x128xf32>,
    return
  }
  func.func @transform_0(%arg0: i32) -> (i32, i32) {
    %c0_i32 = arith.constant 0 : i32
    %c0_i32_0 = arith.constant 0 : i32
    return %c0_i32, %arg0 : i32, i32
  }
  func.func @transform_1(%arg0: i32) -> (i32, i32) {
    %c0_i32 = arith.constant 0 : i32
    %c0_i32_0 = arith.constant 0 : i32
    return %c0_i32, %arg0 : i32, i32
  }
  func.func @transform_2(%arg0: i32) -> (i32, i32) {
    %c0_i32 = arith.constant 0 : i32
    %c0_i32_0 = arith.constant 0 : i32
    %c0_i32_1 = arith.constant 0 : i32
    return %c0_i32, %c0_i32_0 : i32, i32
  }
  func.func @transform_3(%arg0: i32) -> (i32, i32) {
    %c0_i32 = arith.constant 0 : i32
    %c0_i32_0 = arith.constant 0 : i32
    %c0_i32_1 = arith.constant 0 : i32
    return %c0_i32, %c0_i32_0 : i32, i32
  }
  func.func @transform_4(%arg0: i32) -> (i32, i32) {
    %c0_i32 = arith.constant 0 : i32
    %c0_i32_0 = arith.constant 0 : i32
    %c0_i32_1 = arith.constant 0 : i32
    return %c0_i32, %c0_i32_0 : i32, i32
  }
  func.func @transform_5(%arg0: i32) -> (i32, i32) {
    %c0_i32 = arith.constant 0 : i32
    %c0_i32_0 = arith.constant 0 : i32
    %c0_i32_1 = arith.constant 0 : i32
    return %c0_i32, %c0_i32_0 : i32, i32
  }
  func.func @transform_6(%arg0: i32) -> (i32, i32) {
    %c0_i32 = arith.constant 0 : i32
    %c0_i32_0 = arith.constant 0 : i32
    %c0_i32_1 = arith.constant 0 : i32
    return %c0_i32, %c0_i32_0 : i32, i32
  }
  func.func @transform_7(%arg0: i32) -> (i32, i32) {
    %c0_i32 = arith.constant 0 : i32
    %c0_i32_0 = arith.constant 0 : i32
    %c0_i32_1 = arith.constant 0 : i32
    return %c0_i32, %c0_i32_0 : i32, i32
  }
  func.func @transform_8(%arg0: i32) -> (i32, i32) {
    %c0_i32 = arith.constant 0 : i32
    %c0_i32_0 = arith.constant 0 : i32
    %c0_i32_1 = arith.constant 0 : i32
    return %c0_i32, %c0_i32_0 : i32, i32
  }
  func.func @transform_9(%arg0: i32) -> (i32, i32) {
    %c0_i32 = arith.constant 0 : i32
    %c0_i32_0 = arith.constant 0 : i32
    %c0_i32_1 = arith.constant 0 : i32
    return %c0_i32, %c0_i32_0 : i32, i32
  }
  func.func @transform_10(%arg0: i32) -> (i32, i32) {
    %c0_i32 = arith.constant 0 : i32
    %c0_i32_0 = arith.constant 0 : i32
    %c0_i32_1 = arith.constant 0 : i32
    return %c0_i32, %c0_i32_0 : i32, i32
  }
  func.func @transform_11(%arg0: i32) -> (i32, i32) {
    %c0_i32 = arith.constant 0 : i32
    %c0_i32_0 = arith.constant 0 : i32
    %c0_i32_1 = arith.constant 0 : i32
    return %c0_i32, %c0_i32_0 : i32, i32
  }
  func.func @transform_12(%arg0: i32) -> (i32, i32) {
    %c0_i32 = arith.constant 0 : i32
    %c0_i32_0 = arith.constant 0 : i32
    %c0_i32_1 = arith.constant 0 : i32
    return %c0_i32, %c0_i32_0 : i32, i32
  }
  func.func @transform_13(%arg0: i32) -> (i32, i32) {
    %c0_i32 = arith.constant 0 : i32
    %c0_i32_0 = arith.constant 0 : i32
    return %c0_i32, %arg0 : i32, i32
  }
}

</mosaic_0001>

<llo_original>
// kernel: tpu_custom_call.1
$region0: #{tpu_custom_call.1}
  #allocation0 [shape = 'u32[]', space=smem, size = 0x4, offset = 0x4, fixed_abs, tag = 'smem constant byte address 0x4 - core index']
  #allocation1 [shape = 'u32[144,128]{1,0:T(1,128)}', space=vmem, size = 0x12000, scoped, tag = 'internal scratch']
  %s0 = inlined_call_operand.vmem [shape: f32[4,128], index: 0, kind: input, shape index: {}]
  %s1 = inlined_call_operand.vmem [shape: f32[1,128], index: 1, kind: input, shape index: {}]
  %s2 = inlined_call_operand.vmem [shape: f32[32,4], index: 2, kind: input, shape index: {}]
  %s3 = inlined_call_operand.vmem [shape: f32[32,1], index: 3, kind: input, shape index: {}]
  %s4 = inlined_call_operand.vmem [shape: f32[32,1], index: 4, kind: input, shape index: {}]
  %s5 = inlined_call_operand.vmem [shape: f32[32,32], index: 5, kind: input, shape index: {}]
  %s6 = inlined_call_operand.vmem [shape: f32[32,1], index: 6, kind: input, shape index: {}]
  %s7 = inlined_call_operand.vmem [shape: f32[32,32], index: 7, kind: input, shape index: {}]
  %s8 = inlined_call_operand.vmem [shape: f32[32,1], index: 8, kind: input, shape index: {}]
  %s9 = inlined_call_operand.vmem [shape: f32[32,32], index: 9, kind: input, shape index: {}]
  %s10 = inlined_call_operand.vmem [shape: f32[32,1], index: 10, kind: input, shape index: {}]
  %s11 = inlined_call_operand.vmem [shape: f32[4,32], index: 11, kind: input, shape index: {}]
  %s12 = inlined_call_operand.vmem [shape: f32[4,1], index: 12, kind: input, shape index: {}]
  %s13 = inlined_call_operand.hbm [shape: f32[4,128], index: 13, kind: output, shape index: {}]
  %s14 = sld [smem:[#allocation0]]
  $region62: #{tpu_custom_call.1} parent=0
    _
  %s16 = ssub.s32 1, %s14
  %s17 = scalar_select 0, %s16, %s14
  $region1: #{tpu_custom_call.1} parent=0
    #allocation2 [shape = 'u8[2048]{0}', space=vmem, size = 0x800, scoped, tag = 'output window, operand 0, single buffered']
    #allocation3 [shape = 's32[1]{0}', space=sflag, size = 0x4, scoped, tag = 'scoped memory for tpu_custom_call.1']
    %18 = vsyncpa [#allocation3], 0
    // Predicated region
    $region2: #{tpu_custom_call.1} parent=1 // pred_check
      _
    $region3: #{tpu_custom_call.1} parent=1 // pred_check_branch
      %20 = sbr.rel (0) target = $region5
    $region4: #{tpu_custom_call.1} parent=1 // pred_region
      _
    $region5: #{tpu_custom_call.1} parent=1 // pred_fallthru
      _
    // Predicated region
    $region6: #{tpu_custom_call.1} parent=1 // pred_check
      _
    $region7: #{tpu_custom_call.1} parent=1 // pred_check_branch
      %22 = sbr.rel (0) target = $region9
    $region8: #{tpu_custom_call.1} parent=1 // pred_region
      _
    $region9: #{tpu_custom_call.1} parent=1 // pred_fallthru
      _
    // Predicated region
    $region10: #{tpu_custom_call.1} parent=1 // pred_check
      _
    $region11: #{tpu_custom_call.1} parent=1 // pred_check_branch
      %24 = sbr.rel (0) target = $region13
    $region12: #{tpu_custom_call.1} parent=1 // pred_region
      _
    $region13: #{tpu_custom_call.1} parent=1 // pred_fallthru
      _
    // Predicated region
    $region14: #{tpu_custom_call.1} parent=1 // pred_check
      _
    $region15: #{tpu_custom_call.1} parent=1 // pred_check_branch
      %26 = sbr.rel (0) target = $region17
    $region16: #{tpu_custom_call.1} parent=1 // pred_region
      _
    $region17: #{tpu_custom_call.1} parent=1 // pred_fallthru
      _
    // Predicated region
    $region18: #{tpu_custom_call.1} parent=1 // pred_check
      _
    $region19: #{tpu_custom_call.1} parent=1 // pred_check_branch
      %28 = sbr.rel (0) target = $region21
    $region20: #{tpu_custom_call.1} parent=1 // pred_region
      _
    $region21: #{tpu_custom_call.1} parent=1 // pred_fallthru
      _
    // Predicated region
    $region22: #{tpu_custom_call.1} parent=1 // pred_check
      _
    $region23: #{tpu_custom_call.1} parent=1 // pred_check_branch
      %30 = sbr.rel (0) target = $region25
    $region24: #{tpu_custom_call.1} parent=1 // pred_region
      _
    $region25: #{tpu_custom_call.1} parent=1 // pred_fallthru
      _
    // Predicated region
    $region26: #{tpu_custom_call.1} parent=1 // pred_check
      _
    $region27: #{tpu_custom_call.1} parent=1 // pred_check_branch
      %32 = sbr.rel (0) target = $region29
    $region28: #{tpu_custom_call.1} parent=1 // pred_region
      _
    $region29: #{tpu_custom_call.1} parent=1 // pred_fallthru
      _
    // Predicated region
    $region30: #{tpu_custom_call.1} parent=1 // pred_check
      _
    $region31: #{tpu_custom_call.1} parent=1 // pred_check_branch
      %34 = sbr.rel (0) target = $region33
    $region32: #{tpu_custom_call.1} parent=1 // pred_region
      _
    $region33: #{tpu_custom_call.1} parent=1 // pred_fallthru
      _
    // Predicated region
    $region34: #{tpu_custom_call.1} parent=1 // pred_check
      _
    $region35: #{tpu_custom_call.1} parent=1 // pred_check_branch
      %36 = sbr.rel (0) target = $region37
    $region36: #{tpu_custom_call.1} parent=1 // pred_region
      _
    $region37: #{tpu_custom_call.1} parent=1 // pred_fallthru
      _
    // Predicated region
    $region38: #{tpu_custom_call.1} parent=1 // pred_check
      _
    $region39: #{tpu_custom_call.1} parent=1 // pred_check_branch
      %38 = sbr.rel (0) target = $region41
    $region40: #{tpu_custom_call.1} parent=1 // pred_region
      _
    $region41: #{tpu_custom_call.1} parent=1 // pred_fallthru
      _
    // Predicated region
    $region42: #{tpu_custom_call.1} parent=1 // pred_check
      _
    $region43: #{tpu_custom_call.1} parent=1 // pred_check_branch
      %40 = sbr.rel (0) target = $region45
    $region44: #{tpu_custom_call.1} parent=1 // pred_region
      _
    $region45: #{tpu_custom_call.1} parent=1 // pred_fallthru
      _
    // Predicated region
    $region46: #{tpu_custom_call.1} parent=1 // pred_check
      _
    $region47: #{tpu_custom_call.1} parent=1 // pred_check_branch
      %42 = sbr.rel (0) target = $region49
    $region48: #{tpu_custom_call.1} parent=1 // pred_region
      _
    $region49: #{tpu_custom_call.1} parent=1 // pred_fallthru
      _
    // Predicated region
    $region50: #{tpu_custom_call.1} parent=1 // pred_check
      _
    $region51: #{tpu_custom_call.1} parent=1 // pred_check_branch
      %44 = sbr.rel (0) target = $region53
    $region52: #{tpu_custom_call.1} parent=1 // pred_region
      _
    $region53: #{tpu_custom_call.1} parent=1 // pred_fallthru
      _
    %v45 = vld [vmem:[%s0] sm:$0xf]
    %v46 = vld [vmem:[%s1] sm:$0x1]
    %v47 = vld [vmem:[%s2] sm:$0xff]
    %v48 = vld [vmem:[%s2 + $0x8] sm:$0xff]
    %v49 = vld [vmem:[%s2 + $0x10] sm:$0xff]
    %v50 = vld [vmem:[%s2 + $0x18] sm:$0xff]
    %v51 = vld [vmem:[%s3] sm:$0xff]
    %v52 = vld [vmem:[%s3 + $0x8] sm:$0xff]
    %v53 = vld [vmem:[%s3 + $0x10] sm:$0xff]
    %v54 = vld [vmem:[%s3 + $0x18] sm:$0xff]
    %v55 = vld [vmem:[%s4] sm:$0xff]
    %v56 = vld [vmem:[%s4 + $0x8] sm:$0xff]
    %v57 = vld [vmem:[%s4 + $0x10] sm:$0xff]
    %v58 = vld [vmem:[%s4 + $0x18] sm:$0xff]
    %v59 = vld [vmem:[%s5] sm:$0xff]
    %v60 = vld [vmem:[%s5 + $0x8] sm:$0xff]
    %v61 = vld [vmem:[%s5 + $0x10] sm:$0xff]
    %v62 = vld [vmem:[%s5 + $0x18] sm:$0xff]
    %v63 = vld [vmem:[%s7] sm:$0xff]
    %v64 = vld [vmem:[%s7 + $0x8] sm:$0xff]
    %v65 = vld [vmem:[%s7 + $0x10] sm:$0xff]
    %v66 = vld [vmem:[%s7 + $0x18] sm:$0xff]
    %v67 = vld [vmem:[%s9] sm:$0xff]
    %v68 = vld [vmem:[%s9 + $0x8] sm:$0xff]
    %v69 = vld [vmem:[%s9 + $0x10] sm:$0xff]
    %v70 = vld [vmem:[%s9 + $0x18] sm:$0xff]
    %v71 = vld [vmem:[%s6] sm:$0xff]
    %v72 = vld [vmem:[%s6 + $0x8] sm:$0xff]
    %v73 = vld [vmem:[%s6 + $0x10] sm:$0xff]
    %v74 = vld [vmem:[%s6 + $0x18] sm:$0xff]
    %v75 = vld [vmem:[%s8] sm:$0xff]
    %v76 = vld [vmem:[%s8 + $0x8] sm:$0xff]
    %v77 = vld [vmem:[%s8 + $0x10] sm:$0xff]
    %v78 = vld [vmem:[%s8 + $0x18] sm:$0xff]
    %v79 = vld [vmem:[%s10] sm:$0xff]
    %v80 = vld [vmem:[%s10 + $0x8] sm:$0xff]
    %v81 = vld [vmem:[%s10 + $0x10] sm:$0xff]
    %v82 = vld [vmem:[%s10 + $0x18] sm:$0xff]
    %v83 = vld [vmem:[%s11] sm:$0xf]
    %v84 = vld [vmem:[%s12] sm:$0xf]
    %86 = vset.pattern.permute.xlu0 0
    %87 = vperm.xlu0 %86, %v55
    %v88 = vpop.permute.xlu0 %87
    %91 = vset.pattern.permute.xlu0 0
    %92 = vperm.xlu0 %91, %v56
    %v93 = vpop.permute.xlu0 %92
    %96 = vset.pattern.permute.xlu0 0
    %97 = vperm.xlu0 %96, %v57
    %v98 = vpop.permute.xlu0 %97
    %101 = vset.pattern.permute.xlu0 0
    %102 = vperm.xlu0 %101, %v58
    %v103 = vpop.permute.xlu0 %102
    %vm105 = vcmask 31744
    %v107 = vsel %vm105, %v47, 0
    %v110 = vsel %vm105, %v48, 0
    %v113 = vsel %vm105, %v49, 0
    %v116 = vsel %vm105, %v50, 0
    %vm118 = vcmask 1043456
    %v120 = vsel %vm118, %v45, 0
    %122 = vmatprep.subr.mxu0 0.0
    %123 = vmatpush1.msra.mxu0 %v120
    %124 = vmatprep.subr.mxu0 0.0
    %125 = vmatpush1.msra.mxu0 0.0
    %126 = vmatprep.subr.mxu0 0.0
    %127 = vmatpush1.msra.mxu0 0.0
    %128 = vmatprep.subr.mxu0 0.0
    %129 = vmatpush1.msra.mxu0 0.0
    %130 = vmatprep.subr.mxu0 0.0
    %131 = vmatpush1.msra.mxu0 0.0
    %132 = vmatprep.subr.mxu0 0.0
    %133 = vmatpush1.msra.mxu0 0.0
    %134 = vmatprep.subr.mxu0 0.0
    %135 = vmatpush1.msra.mxu0 0.0
    %136 = vmatprep.subr.mxu0 0.0
    %137 = vmatpush1.msra.mxu0 0.0
    %138 = vmatprep.subr.mxu0 0.0
    %139 = vmatpush1.msra.mxu0 0.0
    %140 = vmatprep.subr.mxu0 0.0
    %141 = vmatpush1.msra.mxu0 0.0
    %142 = vmatprep.subr.mxu0 0.0
    %143 = vmatpush1.msra.mxu0 0.0
    %144 = vmatprep.subr.mxu0 0.0
    %145 = vmatpush1.msra.mxu0 0.0
    %146 = vmatprep.subr.mxu0 0.0
    %147 = vmatpush1.msra.mxu0 0.0
    %148 = vmatprep.subr.mxu0 0.0
    %149 = vmatpush1.msra.mxu0 0.0
    %150 = vmatprep.subr.mxu0 0.0
    %151 = vmatpush1.msra.mxu0 0.0
    %152 = vmatprep.subr.mxu0 0.0
    %153 = vmatpush1.msra.mxu0 0.0
    %154 = vmatprep.subr.mxu0 0.0
    %155 = vmatpush1.msra.mxu0 0.0
    %156 = vmatprep.subr.mxu0 0.0
    %157 = vmatpush1.msra.mxu0 0.0
    %158 = vmatprep.subr.mxu0 0.0
    %159 = vmatpush1.msra.mxu0 0.0
    %160 = vmatprep.subr.mxu0 0.0
    %161 = vmatpush1.msra.mxu0 0.0
    %162 = vmatprep.subr.mxu0 0.0
    %163 = vmatpush1.msra.mxu0 0.0
    %164 = vmatprep.subr.mxu0 0.0
    %165 = vmatpush1.msra.mxu0 0.0
    %166 = vmatprep.subr.mxu0 0.0
    %167 = vmatpush1.msra.mxu0 0.0
    %168 = vmatprep.subr.mxu0 0.0
    %169 = vmatpush1.msra.mxu0 0.0
    %170 = vmatprep.subr.mxu0 0.0
    %171 = vmatpush1.msra.mxu0 0.0
    %172 = vmatprep.subr.mxu0 0.0
    %173 = vmatpush1.msra.mxu0 0.0
    %174 = vmatprep.subr.mxu0 0.0
    %175 = vmatpush1.msra.mxu0 0.0
    %176 = vmatprep.subr.mxu0 0.0
    %177 = vmatpush1.msra.mxu0 0.0
    %178 = vmatprep.subr.mxu0 0.0
    %179 = vmatpush1.msra.mxu0 0.0
    %180 = vmatprep.subr.mxu0 0.0
    %181 = vmatpush1.msra.mxu0 0.0
    %182 = vmatprep.subr.mxu0 0.0
    %183 = vmatpush1.msra.mxu0 0.0
    %184 = vmatprep.subr.mxu0 0.0
    %185 = vmatpush1.msra.mxu0 0.0
    %186 = vmatprep.mubr.f32.mxu0 0.0
    %187 = vmatmul.mubr.f32.gmra.mrb[0].mxu0 %v107
    %v188 = vpop.f32.mrb[0].mxu0
    %v189 = vadd.f32 %v88, %v188
    %v190 = vpop.f32.mrb[0].mxu0
    %191 = vmatprep.mubr.f32.mxu0 0.0
    %192 = vmatmul.mubr.f32.gmra.mrb[0].mxu0 %v110
    %v193 = vpop.f32.mrb[0].mxu0
    %v194 = vadd.f32 %v93, %v193
    %v195 = vpop.f32.mrb[0].mxu0
    %196 = vmatprep.mubr.f32.mxu0 0.0
    %197 = vmatmul.mubr.f32.gmra.mrb[0].mxu0 %v113
    %v198 = vpop.f32.mrb[0].mxu0
    %v199 = vadd.f32 %v98, %v198
    %v200 = vpop.f32.mrb[0].mxu0
    %201 = vmatprep.mubr.f32.mxu0 0.0
    %202 = vmatmul.mubr.f32.gmra.mrb[0].mxu0 %v116
    %v203 = vpop.f32.mrb[0].mxu0
    %v204 = vadd.f32 %v103, %v203
    %v205 = vpop.f32.mrb[0].mxu0
    %206 = vdwg.mxu0
    %208 = vset.pattern.permute.xlu0 0
    %209 = vperm.xlu0 %208, %v51
    %v210 = vpop.permute.xlu0 %209
    %213 = vset.pattern.permute.xlu0 0
    %214 = vperm.xlu0 %213, %v52
    %v215 = vpop.permute.xlu0 %214
    %218 = vset.pattern.permute.xlu0 0
    %219 = vperm.xlu0 %218, %v53
    %v220 = vpop.permute.xlu0 %219
    %223 = vset.pattern.permute.xlu0 0
    %224 = vperm.xlu0 %223, %v54
    %v225 = vpop.permute.xlu0 %224
    %v228 = vlaneseq
    %v229 = vshrl.u32 %v228, 7
    %v230 = vsub.s32 0, %v229
    %v231 = vrot.slane %v46, %v230
    %v233 = vmul.f32 %v210, %v231
    %v234 = vmul.f32 %v215, %v231
    %v235 = vmul.f32 %v220, %v231
    %v236 = vmul.f32 %v225, %v231
    %v237 = vadd.f32 %v189, %v233
    %v238 = vadd.f32 %v194, %v234
    %v239 = vadd.f32 %v199, %v235
    %v240 = vadd.f32 %v204, %v236
    %v241 = vtanh.pop %v237
    %v242 = vtanh.pop %v238
    %v243 = vtanh.pop %v239
    %v244 = vtanh.pop %v240
    %246 = vset.pattern.permute.xlu0 0
    %247 = vperm.xlu0 %246, %v71
    %v248 = vpop.permute.xlu0 %247
    %251 = vset.pattern.permute.xlu0 0
    %252 = vperm.xlu0 %251, %v72
    %v253 = vpop.permute.xlu0 %252
    %256 = vset.pattern.permute.xlu0 0
    %257 = vperm.xlu0 %256, %v73
    %v258 = vpop.permute.xlu0 %257
    %261 = vset.pattern.permute.xlu0 0
    %262 = vperm.xlu0 %261, %v74
    %v263 = vpop.permute.xlu0 %262
    %vm265 = vcmask 261120
    %v267 = vsel %vm265, %v59, 0
    %v270 = vsel %vm265, %v60, 0
    %v273 = vsel %vm265, %v61, 0
    %v276 = vsel %vm265, %v62, 0
    %278 = vmatprep.subr.mxu0 0.0
    %279 = vmatpush1.msra.mxu0 %v241
    %280 = vmatprep.subr.mxu0 0.0
    %281 = vmatpush1.msra.mxu0 %v242
    %282 = vmatprep.subr.mxu0 0.0
    %283 = vmatpush1.msra.mxu0 %v243
    %284 = vmatprep.subr.mxu0 0.0
    %285 = vmatpush1.msra.mxu0 %v244
    %286 = vmatprep.subr.mxu0 0.0
    %287 = vmatpush1.msra.mxu0 0.0
    %288 = vmatprep.subr.mxu0 0.0
    %289 = vmatpush1.msra.mxu0 0.0
    %290 = vmatprep.subr.mxu0 0.0
    %291 = vmatpush1.msra.mxu0 0.0
    %292 = vmatprep.subr.mxu0 0.0
    %293 = vmatpush1.msra.mxu0 0.0
    %294 = vmatprep.subr.mxu0 0.0
    %295 = vmatpush1.msra.mxu0 0.0
    %296 = vmatprep.subr.mxu0 0.0
    %297 = vmatpush1.msra.mxu0 0.0
    %298 = vmatprep.subr.mxu0 0.0
    %299 = vmatpush1.msra.mxu0 0.0
    %300 = vmatprep.subr.mxu0 0.0
    %301 = vmatpush1.msra.mxu0 0.0
    %302 = vmatprep.subr.mxu0 0.0
    %303 = vmatpush1.msra.mxu0 0.0
    %304 = vmatprep.subr.mxu0 0.0
    %305 = vmatpush1.msra.mxu0 0.0
    %306 = vmatprep.subr.mxu0 0.0
    %307 = vmatpush1.msra.mxu0 0.0
    %308 = vmatprep.subr.mxu0 0.0
    %309 = vmatpush1.msra.mxu0 0.0
    %310 = vmatprep.subr.mxu0 0.0
    %311 = vmatpush1.msra.mxu0 0.0
    %312 = vmatprep.subr.mxu0 0.0
    %313 = vmatpush1.msra.mxu0 0.0
    %314 = vmatprep.subr.mxu0 0.0
    %315 = vmatpush1.msra.mxu0 0.0
    %316 = vmatprep.subr.mxu0 0.0
    %317 = vmatpush1.msra.mxu0 0.0
    %318 = vmatprep.subr.mxu0 0.0
    %319 = vmatpush1.msra.mxu0 0.0
    %320 = vmatprep.subr.mxu0 0.0
    %321 = vmatpush1.msra.mxu0 0.0
    %322 = vmatprep.subr.mxu0 0.0
    %323 = vmatpush1.msra.mxu0 0.0
    %324 = vmatprep.subr.mxu0 0.0
    %325 = vmatpush1.msra.mxu0 0.0
    %326 = vmatprep.subr.mxu0 0.0
    %327 = vmatpush1.msra.mxu0 0.0
    %328 = vmatprep.subr.mxu0 0.0
    %329 = vmatpush1.msra.mxu0 0.0
    %330 = vmatprep.subr.mxu0 0.0
    %331 = vmatpush1.msra.mxu0 0.0
    %332 = vmatprep.subr.mxu0 0.0
    %333 = vmatpush1.msra.mxu0 0.0
    %334 = vmatprep.subr.mxu0 0.0
    %335 = vmatpush1.msra.mxu0 0.0
    %336 = vmatprep.subr.mxu0 0.0
    %337 = vmatpush1.msra.mxu0 0.0
    %338 = vmatprep.subr.mxu0 0.0
    %339 = vmatpush1.msra.mxu0 0.0
    %340 = vmatprep.subr.mxu0 0.0
    %341 = vmatpush1.msra.mxu0 0.0
    %342 = vmatprep.mubr.f32.mxu0 0.0
    %343 = vmatmul.mubr.f32.gmra.mrb[0].mxu0 %v267
    %v344 = vpop.f32.mrb[0].mxu0
    %v345 = vadd.f32 %v248, %v344
    %v346 = vpop.f32.mrb[0].mxu0
    %347 = vmatprep.mubr.f32.mxu0 0.0
    %348 = vmatmul.mubr.f32.gmra.mrb[0].mxu0 %v270
    %v349 = vpop.f32.mrb[0].mxu0
    %v350 = vadd.f32 %v253, %v349
    %v351 = vpop.f32.mrb[0].mxu0
    %352 = vmatprep.mubr.f32.mxu0 0.0
    %353 = vmatmul.mubr.f32.gmra.mrb[0].mxu0 %v273
    %v354 = vpop.f32.mrb[0].mxu0
    %v355 = vadd.f32 %v258, %v354
    %v356 = vpop.f32.mrb[0].mxu0
    %357 = vmatprep.mubr.f32.mxu0 0.0
    %358 = vmatmul.mubr.f32.gmra.mrb[0].mxu0 %v276
    %v359 = vpop.f32.mrb[0].mxu0
    %v360 = vadd.f32 %v263, %v359
    %v361 = vpop.f32.mrb[0].mxu0
    %362 = vdwg.mxu0
    %v363 = vtanh.pop %v345
    %v364 = vtanh.pop %v350
    %v365 = vtanh.pop %v355
    %v366 = vtanh.pop %v360
    %v367 = vadd.f32 %v241, %v363
    %v368 = vadd.f32 %v242, %v364
    %v369 = vadd.f32 %v243, %v365
    %v370 = vadd.f32 %v244, %v366
    %372 = vset.pattern.permute.xlu0 0
    %373 = vperm.xlu0 %372, %v75
    %v374 = vpop.permute.xlu0 %373
    %377 = vset.pattern.permute.xlu0 0
    %378 = vperm.xlu0 %377, %v76
    %v379 = vpop.permute.xlu0 %378
    %382 = vset.pattern.permute.xlu0 0
    %383 = vperm.xlu0 %382, %v77
    %v384 = vpop.permute.xlu0 %383
    %387 = vset.pattern.permute.xlu0 0
    %388 = vperm.xlu0 %387, %v78
    %v389 = vpop.permute.xlu0 %388
    %v392 = vsel %vm265, %v63, 0
    %v395 = vsel %vm265, %v64, 0
    %v398 = vsel %vm265, %v65, 0
    %v401 = vsel %vm265, %v66, 0
    %403 = vmatprep.subr.mxu0 0.0
    %404 = vmatpush1.msra.mxu0 %v367
    %405 = vmatprep.subr.mxu0 0.0
    %406 = vmatpush1.msra.mxu0 %v368
    %407 = vmatprep.subr.mxu0 0.0
    %408 = vmatpush1.msra.mxu0 %v369
    %409 = vmatprep.subr.mxu0 0.0
    %410 = vmatpush1.msra.mxu0 %v370
    %411 = vmatprep.subr.mxu0 0.0
    %412 = vmatpush1.msra.mxu0 0.0
    %413 = vmatprep.subr.mxu0 0.0
    %414 = vmatpush1.msra.mxu0 0.0
    %415 = vmatprep.subr.mxu0 0.0
    %416 = vmatpush1.msra.mxu0 0.0
    %417 = vmatprep.subr.mxu0 0.0
    %418 = vmatpush1.msra.mxu0 0.0
    %419 = vmatprep.subr.mxu0 0.0
    %420 = vmatpush1.msra.mxu0 0.0
    %421 = vmatprep.subr.mxu0 0.0
    %422 = vmatpush1.msra.mxu0 0.0
    %423 = vmatprep.subr.mxu0 0.0
    %424 = vmatpush1.msra.mxu0 0.0
    %425 = vmatprep.subr.mxu0 0.0
    %426 = vmatpush1.msra.mxu0 0.0
    %427 = vmatprep.subr.mxu0 0.0
    %428 = vmatpush1.msra.mxu0 0.0
    %429 = vmatprep.subr.mxu0 0.0
    %430 = vmatpush1.msra.mxu0 0.0
    %431 = vmatprep.subr.mxu0 0.0
    %432 = vmatpush1.msra.mxu0 0.0
    %433 = vmatprep.subr.mxu0 0.0
    %434 = vmatpush1.msra.mxu0 0.0
    %435 = vmatprep.subr.mxu0 0.0
    %436 = vmatpush1.msra.mxu0 0.0
    %437 = vmatprep.subr.mxu0 0.0
    %438 = vmatpush1.msra.mxu0 0.0
    %439 = vmatprep.subr.mxu0 0.0
    %440 = vmatpush1.msra.mxu0 0.0
    %441 = vmatprep.subr.mxu0 0.0
    %442 = vmatpush1.msra.mxu0 0.0
    %443 = vmatprep.subr.mxu0 0.0
    %444 = vmatpush1.msra.mxu0 0.0
    %445 = vmatprep.subr.mxu0 0.0
    %446 = vmatpush1.msra.mxu0 0.0
    %447 = vmatprep.subr.mxu0 0.0
    %448 = vmatpush1.msra.mxu0 0.0
    %449 = vmatprep.subr.mxu0 0.0
    %450 = vmatpush1.msra.mxu0 0.0
    %451 = vmatprep.subr.mxu0 0.0
    %452 = vmatpush1.msra.mxu0 0.0
    %453 = vmatprep.subr.mxu0 0.0
    %454 = vmatpush1.msra.mxu0 0.0
    %455 = vmatprep.subr.mxu0 0.0
    %456 = vmatpush1.msra.mxu0 0.0
    %457 = vmatprep.subr.mxu0 0.0
    %458 = vmatpush1.msra.mxu0 0.0
    %459 = vmatprep.subr.mxu0 0.0
    %460 = vmatpush1.msra.mxu0 0.0
    %461 = vmatprep.subr.mxu0 0.0
    %462 = vmatpush1.msra.mxu0 0.0
    %463 = vmatprep.subr.mxu0 0.0
    %464 = vmatpush1.msra.mxu0 0.0
    %465 = vmatprep.subr.mxu0 0.0
    %466 = vmatpush1.msra.mxu0 0.0
    %467 = vmatprep.mubr.f32.mxu0 0.0
    %468 = vmatmul.mubr.f32.gmra.mrb[0].mxu0 %v392
    %v469 = vpop.f32.mrb[0].mxu0
    %v470 = vadd.f32 %v374, %v469
    %v471 = vpop.f32.mrb[0].mxu0
    %472 = vmatprep.mubr.f32.mxu0 0.0
    %473 = vmatmul.mubr.f32.gmra.mrb[0].mxu0 %v395
    %v474 = vpop.f32.mrb[0].mxu0
    %v475 = vadd.f32 %v379, %v474
    %v476 = vpop.f32.mrb[0].mxu0
    %477 = vmatprep.mubr.f32.mxu0 0.0
    %478 = vmatmul.mubr.f32.gmra.mrb[0].mxu0 %v398
    %v479 = vpop.f32.mrb[0].mxu0
    %v480 = vadd.f32 %v384, %v479
    %v481 = vpop.f32.mrb[0].mxu0
    %482 = vmatprep.mubr.f32.mxu0 0.0
    %483 = vmatmul.mubr.f32.gmra.mrb[0].mxu0 %v401
    %v484 = vpop.f32.mrb[0].mxu0
    %v485 = vadd.f32 %v389, %v484
    %v486 = vpop.f32.mrb[0].mxu0
    %487 = vdwg.mxu0
    %v488 = vtanh.pop %v470
    %v489 = vtanh.pop %v475
    %v490 = vtanh.pop %v480
    %v491 = vtanh.pop %v485
    %v492 = vadd.f32 %v367, %v488
    %v493 = vadd.f32 %v368, %v489
    %v494 = vadd.f32 %v369, %v490
    %v495 = vadd.f32 %v370, %v491
    %497 = vset.pattern.permute.xlu0 0
    %498 = vperm.xlu0 %497, %v79
    %v499 = vpop.permute.xlu0 %498
    %502 = vset.pattern.permute.xlu0 0
    %503 = vperm.xlu0 %502, %v80
    %v504 = vpop.permute.xlu0 %503
    %507 = vset.pattern.permute.xlu0 0
    %508 = vperm.xlu0 %507, %v81
    %v509 = vpop.permute.xlu0 %508
    %512 = vset.pattern.permute.xlu0 0
    %513 = vperm.xlu0 %512, %v82
    %v514 = vpop.permute.xlu0 %513
    %v517 = vsel %vm265, %v67, 0
    %v520 = vsel %vm265, %v68, 0
    %v523 = vsel %vm265, %v69, 0
    %v526 = vsel %vm265, %v70, 0
    %528 = vmatprep.subr.mxu0 0.0
    %529 = vmatpush1.msra.mxu0 %v492
    %530 = vmatprep.subr.mxu0 0.0
    %531 = vmatpush1.msra.mxu0 %v493
    %532 = vmatprep.subr.mxu0 0.0
    %533 = vmatpush1.msra.mxu0 %v494
    %534 = vmatprep.subr.mxu0 0.0
    %535 = vmatpush1.msra.mxu0 %v495
    %536 = vmatprep.subr.mxu0 0.0
    %537 = vmatpush1.msra.mxu0 0.0
    %538 = vmatprep.subr.mxu0 0.0
    %539 = vmatpush1.msra.mxu0 0.0
    %540 = vmatprep.subr.mxu0 0.0
    %541 = vmatpush1.msra.mxu0 0.0
    %542 = vmatprep.subr.mxu0 0.0
    %543 = vmatpush1.msra.mxu0 0.0
    %544 = vmatprep.subr.mxu0 0.0
    %545 = vmatpush1.msra.mxu0 0.0
    %546 = vmatprep.subr.mxu0 0.0
    %547 = vmatpush1.msra.mxu0 0.0
    %548 = vmatprep.subr.mxu0 0.0
    %549 = vmatpush1.msra.mxu0 0.0
    %550 = vmatprep.subr.mxu0 0.0
    %551 = vmatpush1.msra.mxu0 0.0
    %552 = vmatprep.subr.mxu0 0.0
    %553 = vmatpush1.msra.mxu0 0.0
    %554 = vmatprep.subr.mxu0 0.0
    %555 = vmatpush1.msra.mxu0 0.0
    %556 = vmatprep.subr.mxu0 0.0
    %557 = vmatpush1.msra.mxu0 0.0
    %558 = vmatprep.subr.mxu0 0.0
    %559 = vmatpush1.msra.mxu0 0.0
    %560 = vmatprep.subr.mxu0 0.0
    %561 = vmatpush1.msra.mxu0 0.0
    %562 = vmatprep.subr.mxu0 0.0
    %563 = vmatpush1.msra.mxu0 0.0
    %564 = vmatprep.subr.mxu0 0.0
    %565 = vmatpush1.msra.mxu0 0.0
    %566 = vmatprep.subr.mxu0 0.0
    %567 = vmatpush1.msra.mxu0 0.0
    %568 = vmatprep.subr.mxu0 0.0
    %569 = vmatpush1.msra.mxu0 0.0
    %570 = vmatprep.subr.mxu0 0.0
    %571 = vmatpush1.msra.mxu0 0.0
    %572 = vmatprep.subr.mxu0 0.0
    %573 = vmatpush1.msra.mxu0 0.0
    %574 = vmatprep.subr.mxu0 0.0
    %575 = vmatpush1.msra.mxu0 0.0
    %576 = vmatprep.subr.mxu0 0.0
    %577 = vmatpush1.msra.mxu0 0.0
    %578 = vmatprep.subr.mxu0 0.0
    %579 = vmatpush1.msra.mxu0 0.0
    %580 = vmatprep.subr.mxu0 0.0
    %581 = vmatpush1.msra.mxu0 0.0
    %582 = vmatprep.subr.mxu0 0.0
    %583 = vmatpush1.msra.mxu0 0.0
    %584 = vmatprep.subr.mxu0 0.0
    %585 = vmatpush1.msra.mxu0 0.0
    %586 = vmatprep.subr.mxu0 0.0
    %587 = vmatpush1.msra.mxu0 0.0
    %588 = vmatprep.subr.mxu0 0.0
    %589 = vmatpush1.msra.mxu0 0.0
    %590 = vmatprep.subr.mxu0 0.0
    %591 = vmatpush1.msra.mxu0 0.0
    %592 = vmatprep.mubr.f32.mxu0 0.0
    %593 = vmatmul.mubr.f32.gmra.mrb[0].mxu0 %v517
    %v594 = vpop.f32.mrb[0].mxu0
    %v595 = vadd.f32 %v499, %v594
    %v596 = vpop.f32.mrb[0].mxu0
    %597 = vmatprep.mubr.f32.mxu0 0.0
    %598 = vmatmul.mubr.f32.gmra.mrb[0].mxu0 %v520
    %v599 = vpop.f32.mrb[0].mxu0
    %v600 = vadd.f32 %v504, %v599
    %v601 = vpop.f32.mrb[0].mxu0
    %602 = vmatprep.mubr.f32.mxu0 0.0
    %603 = vmatmul.mubr.f32.gmra.mrb[0].mxu0 %v523
    %v604 = vpop.f32.mrb[0].mxu0
    %v605 = vadd.f32 %v509, %v604
    %v606 = vpop.f32.mrb[0].mxu0
    %607 = vmatprep.mubr.f32.mxu0 0.0
    %608 = vmatmul.mubr.f32.gmra.mrb[0].mxu0 %v526
    %v609 = vpop.f32.mrb[0].mxu0
    %v610 = vadd.f32 %v514, %v609
    %v611 = vpop.f32.mrb[0].mxu0
    %612 = vdwg.mxu0
    %v613 = vtanh.pop %v595
    %v614 = vtanh.pop %v600
    %v615 = vtanh.pop %v605
    %v616 = vtanh.pop %v610
    %v617 = vadd.f32 %v492, %v613
    %v618 = vadd.f32 %v493, %v614
    %v619 = vadd.f32 %v494, %v615
    %v620 = vadd.f32 %v495, %v616
    %622 = vset.pattern.permute.xlu0 0
    %623 = vperm.xlu0 %622, %v84
    %v624 = vpop.permute.xlu0 %623
    %v627 = vsel %vm265, %v83, 0
    %629 = vmatprep.subr.mxu0 0.0
    %630 = vmatpush1.msra.mxu0 %v617
    %631 = vmatprep.subr.mxu0 0.0
    %632 = vmatpush1.msra.mxu0 %v618
    %633 = vmatprep.subr.mxu0 0.0
    %634 = vmatpush1.msra.mxu0 %v619
    %635 = vmatprep.subr.mxu0 0.0
    %636 = vmatpush1.msra.mxu0 %v620
    %637 = vmatprep.subr.mxu0 0.0
    %638 = vmatpush1.msra.mxu0 0.0
    %639 = vmatprep.subr.mxu0 0.0
    %640 = vmatpush1.msra.mxu0 0.0
    %641 = vmatprep.subr.mxu0 0.0
    %642 = vmatpush1.msra.mxu0 0.0
    %643 = vmatprep.subr.mxu0 0.0
    %644 = vmatpush1.msra.mxu0 0.0
    %645 = vmatprep.subr.mxu0 0.0
    %646 = vmatpush1.msra.mxu0 0.0
    %647 = vmatprep.subr.mxu0 0.0
    %648 = vmatpush1.msra.mxu0 0.0
    %649 = vmatprep.subr.mxu0 0.0
    %650 = vmatpush1.msra.mxu0 0.0
    %651 = vmatprep.subr.mxu0 0.0
    %652 = vmatpush1.msra.mxu0 0.0
    %653 = vmatprep.subr.mxu0 0.0
    %654 = vmatpush1.msra.mxu0 0.0
    %655 = vmatprep.subr.mxu0 0.0
    %656 = vmatpush1.msra.mxu0 0.0
    %657 = vmatprep.subr.mxu0 0.0
    %658 = vmatpush1.msra.mxu0 0.0
    %659 = vmatprep.subr.mxu0 0.0
    %660 = vmatpush1.msra.mxu0 0.0
    %661 = vmatprep.subr.mxu0 0.0
    %662 = vmatpush1.msra.mxu0 0.0
    %663 = vmatprep.subr.mxu0 0.0
    %664 = vmatpush1.msra.mxu0 0.0
    %665 = vmatprep.subr.mxu0 0.0
    %666 = vmatpush1.msra.mxu0 0.0
    %667 = vmatprep.subr.mxu0 0.0
    %668 = vmatpush1.msra.mxu0 0.0
    %669 = vmatprep.subr.mxu0 0.0
    %670 = vmatpush1.msra.mxu0 0.0
    %671 = vmatprep.subr.mxu0 0.0
    %672 = vmatpush1.msra.mxu0 0.0
    %673 = vmatprep.subr.mxu0 0.0
    %674 = vmatpush1.msra.mxu0 0.0
    %675 = vmatprep.subr.mxu0 0.0
    %676 = vmatpush1.msra.mxu0 0.0
    %677 = vmatprep.subr.mxu0 0.0
    %678 = vmatpush1.msra.mxu0 0.0
    %679 = vmatprep.subr.mxu0 0.0
    %680 = vmatpush1.msra.mxu0 0.0
    %681 = vmatprep.subr.mxu0 0.0
    %682 = vmatpush1.msra.mxu0 0.0
    %683 = vmatprep.subr.mxu0 0.0
    %684 = vmatpush1.msra.mxu0 0.0
    %685 = vmatprep.subr.mxu0 0.0
    %686 = vmatpush1.msra.mxu0 0.0
    %687 = vmatprep.subr.mxu0 0.0
    %688 = vmatpush1.msra.mxu0 0.0
    %689 = vmatprep.subr.mxu0 0.0
    %690 = vmatpush1.msra.mxu0 0.0
    %691 = vmatprep.subr.mxu0 0.0
    %692 = vmatpush1.msra.mxu0 0.0
    %693 = vmatprep.mubr.f32.mxu0 0.0
    %694 = vmatmul.mubr.f32.gmra.mrb[0].mxu0 %v627
    %v695 = vpop.f32.mrb[0].mxu0
    %v696 = vadd.f32 %v624, %v695
    %v697 = vpop.f32.mrb[0].mxu0
    %698 = vdwg.mxu0
    %v699 = vtanh.pop %v189
    %v700 = vtanh.pop %v194
    %v701 = vtanh.pop %v199
    %v702 = vtanh.pop %v204
    %703 = vmatprep.subr.mxu0 0.0
    %704 = vmatpush1.msra.mxu0 %v699
    %705 = vmatprep.subr.mxu0 0.0
    %706 = vmatpush1.msra.mxu0 %v700
    %707 = vmatprep.subr.mxu0 0.0
    %708 = vmatpush1.msra.mxu0 %v701
    %709 = vmatprep.subr.mxu0 0.0
    %710 = vmatpush1.msra.mxu0 %v702
    %711 = vmatprep.subr.mxu0 0.0
    %712 = vmatpush1.msra.mxu0 0.0
    %713 = vmatprep.subr.mxu0 0.0
    %714 = vmatpush1.msra.mxu0 0.0
    %715 = vmatprep.subr.mxu0 0.0
    %716 = vmatpush1.msra.mxu0 0.0
    %717 = vmatprep.subr.mxu0 0.0
    %718 = vmatpush1.msra.mxu0 0.0
    %719 = vmatprep.subr.mxu0 0.0
    %720 = vmatpush1.msra.mxu0 0.0
    %721 = vmatprep.subr.mxu0 0.0
    %722 = vmatpush1.msra.mxu0 0.0
    %723 = vmatprep.subr.mxu0 0.0
    %724 = vmatpush1.msra.mxu0 0.0
    %725 = vmatprep.subr.mxu0 0.0
    %726 = vmatpush1.msra.mxu0 0.0
    %727 = vmatprep.subr.mxu0 0.0
    %728 = vmatpush1.msra.mxu0 0.0
    %729 = vmatprep.subr.mxu0 0.0
    %730 = vmatpush1.msra.mxu0 0.0
    %731 = vmatprep.subr.mxu0 0.0
    %732 = vmatpush1.msra.mxu0 0.0
    %733 = vmatprep.subr.mxu0 0.0
    %734 = vmatpush1.msra.mxu0 0.0
    %735 = vmatprep.subr.mxu0 0.0
    %736 = vmatpush1.msra.mxu0 0.0
    %737 = vmatprep.subr.mxu0 0.0
    %738 = vmatpush1.msra.mxu0 0.0
    %739 = vmatprep.subr.mxu0 0.0
    %740 = vmatpush1.msra.mxu0 0.0
    %741 = vmatprep.subr.mxu0 0.0
    %742 = vmatpush1.msra.mxu0 0.0
    %743 = vmatprep.subr.mxu0 0.0
    %744 = vmatpush1.msra.mxu0 0.0
    %745 = vmatprep.subr.mxu0 0.0
    %746 = vmatpush1.msra.mxu0 0.0
    %747 = vmatprep.subr.mxu0 0.0
    %748 = vmatpush1.msra.mxu0 0.0
    %749 = vmatprep.subr.mxu0 0.0
    %750 = vmatpush1.msra.mxu0 0.0
    %751 = vmatprep.subr.mxu0 0.0
    %752 = vmatpush1.msra.mxu0 0.0
    %753 = vmatprep.subr.mxu0 0.0
    %754 = vmatpush1.msra.mxu0 0.0
    %755 = vmatprep.subr.mxu0 0.0
    %756 = vmatpush1.msra.mxu0 0.0
    %757 = vmatprep.subr.mxu0 0.0
    %758 = vmatpush1.msra.mxu0 0.0
    %759 = vmatprep.subr.mxu0 0.0
    %760 = vmatpush1.msra.mxu0 0.0
    %761 = vmatprep.subr.mxu0 0.0
    %762 = vmatpush1.msra.mxu0 0.0
    %763 = vmatprep.subr.mxu0 0.0
    %764 = vmatpush1.msra.mxu0 0.0
    %765 = vmatprep.subr.mxu0 0.0
    %766 = vmatpush1.msra.mxu0 0.0
    %767 = vmatprep.mubr.f32.mxu0 0.0
    %768 = vmatmul.mubr.f32.gmra.mrb[0].mxu0 %v267
    %v769 = vpop.f32.mrb[0].mxu0
    %v770 = vadd.f32 %v248, %v769
    %v771 = vpop.f32.mrb[0].mxu0
    %772 = vmatprep.mubr.f32.mxu0 0.0
    %773 = vmatmul.mubr.f32.gmra.mrb[0].mxu0 %v270
    %v774 = vpop.f32.mrb[0].mxu0
    %v775 = vadd.f32 %v253, %v774
    %v776 = vpop.f32.mrb[0].mxu0
    %777 = vmatprep.mubr.f32.mxu0 0.0
    %778 = vmatmul.mubr.f32.gmra.mrb[0].mxu0 %v273
    %v779 = vpop.f32.mrb[0].mxu0
    %v780 = vadd.f32 %v258, %v779
    %v781 = vpop.f32.mrb[0].mxu0
    %782 = vmatprep.mubr.f32.mxu0 0.0
    %783 = vmatmul.mubr.f32.gmra.mrb[0].mxu0 %v276
    %v784 = vpop.f32.mrb[0].mxu0
    %v785 = vadd.f32 %v263, %v784
    %v786 = vpop.f32.mrb[0].mxu0
    %787 = vdwg.mxu0
    %v788 = vtanh.pop %v770
    %v789 = vtanh.pop %v775
    %v790 = vtanh.pop %v780
    %v791 = vtanh.pop %v785
    %v792 = vadd.f32 %v699, %v788
    %v793 = vadd.f32 %v700, %v789
    %v794 = vadd.f32 %v701, %v790
    %v795 = vadd.f32 %v702, %v791
    %796 = vmatprep.subr.mxu0 0.0
    %797 = vmatpush1.msra.mxu0 %v792
    %798 = vmatprep.subr.mxu0 0.0
    %799 = vmatpush1.msra.mxu0 %v793
    %800 = vmatprep.subr.mxu0 0.0
    %801 = vmatpush1.msra.mxu0 %v794
    %802 = vmatprep.subr.mxu0 0.0
    %803 = vmatpush1.msra.mxu0 %v795
    %804 = vmatprep.subr.mxu0 0.0
    %805 = vmatpush1.msra.mxu0 0.0
    %806 = vmatprep.subr.mxu0 0.0
    %807 = vmatpush1.msra.mxu0 0.0
    %808 = vmatprep.subr.mxu0 0.0
    %809 = vmatpush1.msra.mxu0 0.0
    %810 = vmatprep.subr.mxu0 0.0
    %811 = vmatpush1.msra.mxu0 0.0
    %812 = vmatprep.subr.mxu0 0.0
    %813 = vmatpush1.msra.mxu0 0.0
    %814 = vmatprep.subr.mxu0 0.0
    %815 = vmatpush1.msra.mxu0 0.0
    %816 = vmatprep.subr.mxu0 0.0
    %817 = vmatpush1.msra.mxu0 0.0
    %818 = vmatprep.subr.mxu0 0.0
    %819 = vmatpush1.msra.mxu0 0.0
    %820 = vmatprep.subr.mxu0 0.0
    %821 = vmatpush1.msra.mxu0 0.0
    %822 = vmatprep.subr.mxu0 0.0
    %823 = vmatpush1.msra.mxu0 0.0
    %824 = vmatprep.subr.mxu0 0.0
    %825 = vmatpush1.msra.mxu0 0.0
    %826 = vmatprep.subr.mxu0 0.0
    %827 = vmatpush1.msra.mxu0 0.0
    %828 = vmatprep.subr.mxu0 0.0
    %829 = vmatpush1.msra.mxu0 0.0
    %830 = vmatprep.subr.mxu0 0.0
    %831 = vmatpush1.msra.mxu0 0.0
    %832 = vmatprep.subr.mxu0 0.0
    %833 = vmatpush1.msra.mxu0 0.0
    %834 = vmatprep.subr.mxu0 0.0
    %835 = vmatpush1.msra.mxu0 0.0
    %836 = vmatprep.subr.mxu0 0.0
    %837 = vmatpush1.msra.mxu0 0.0
    %838 = vmatprep.subr.mxu0 0.0
    %839 = vmatpush1.msra.mxu0 0.0
    %840 = vmatprep.subr.mxu0 0.0
    %841 = vmatpush1.msra.mxu0 0.0
    %842 = vmatprep.subr.mxu0 0.0
    %843 = vmatpush1.msra.mxu0 0.0
    %844 = vmatprep.subr.mxu0 0.0
    %845 = vmatpush1.msra.mxu0 0.0
    %846 = vmatprep.subr.mxu0 0.0
    %847 = vmatpush1.msra.mxu0 0.0
    %848 = vmatprep.subr.mxu0 0.0
    %849 = vmatpush1.msra.mxu0 0.0
    %850 = vmatprep.subr.mxu0 0.0
    %851 = vmatpush1.msra.mxu0 0.0
    %852 = vmatprep.subr.mxu0 0.0
    %853 = vmatpush1.msra.mxu0 0.0
    %854 = vmatprep.subr.mxu0 0.0
    %855 = vmatpush1.msra.mxu0 0.0
    %856 = vmatprep.subr.mxu0 0.0
    %857 = vmatpush1.msra.mxu0 0.0
    %858 = vmatprep.subr.mxu0 0.0
    %859 = vmatpush1.msra.mxu0 0.0
    %860 = vmatprep.mubr.f32.mxu0 0.0
    %861 = vmatmul.mubr.f32.gmra.mrb[0].mxu0 %v392
    %v862 = vpop.f32.mrb[0].mxu0
    %v863 = vadd.f32 %v374, %v862
    %v864 = vpop.f32.mrb[0].mxu0
    %865 = vmatprep.mubr.f32.mxu0 0.0
    %866 = vmatmul.mubr.f32.gmra.mrb[0].mxu0 %v395
    %v867 = vpop.f32.mrb[0].mxu0
    %v868 = vadd.f32 %v379, %v867
    %v869 = vpop.f32.mrb[0].mxu0
    %870 = vmatprep.mubr.f32.mxu0 0.0
    %871 = vmatmul.mubr.f32.gmra.mrb[0].mxu0 %v398
    %v872 = vpop.f32.mrb[0].mxu0
    %v873 = vadd.f32 %v384, %v872
    %v874 = vpop.f32.mrb[0].mxu0
    %875 = vmatprep.mubr.f32.mxu0 0.0
    %876 = vmatmul.mubr.f32.gmra.mrb[0].mxu0 %v401
    %v877 = vpop.f32.mrb[0].mxu0
    %v878 = vadd.f32 %v389, %v877
    %v879 = vpop.f32.mrb[0].mxu0
    %880 = vdwg.mxu0
    %v881 = vtanh.pop %v863
    %v882 = vtanh.pop %v868
    %v883 = vtanh.pop %v873
    %v884 = vtanh.pop %v878
    %v885 = vadd.f32 %v792, %v881
    %v886 = vadd.f32 %v793, %v882
    %v887 = vadd.f32 %v794, %v883
    %v888 = vadd.f32 %v795, %v884
    %889 = vmatprep.subr.mxu0 0.0
    %890 = vmatpush1.msra.mxu0 %v885
    %891 = vmatprep.subr.mxu0 0.0
    %892 = vmatpush1.msra.mxu0 %v886
    %893 = vmatprep.subr.mxu0 0.0
    %894 = vmatpush1.msra.mxu0 %v887
    %895 = vmatprep.subr.mxu0 0.0
    %896 = vmatpush1.msra.mxu0 %v888
    %897 = vmatprep.subr.mxu0 0.0
    %898 = vmatpush1.msra.mxu0 0.0
    %899 = vmatprep.subr.mxu0 0.0
    %900 = vmatpush1.msra.mxu0 0.0
    %901 = vmatprep.subr.mxu0 0.0
    %902 = vmatpush1.msra.mxu0 0.0
    %903 = vmatprep.subr.mxu0 0.0
    %904 = vmatpush1.msra.mxu0 0.0
    %905 = vmatprep.subr.mxu0 0.0
    %906 = vmatpush1.msra.mxu0 0.0
    %907 = vmatprep.subr.mxu0 0.0
    %908 = vmatpush1.msra.mxu0 0.0
    %909 = vmatprep.subr.mxu0 0.0
    %910 = vmatpush1.msra.mxu0 0.0
    %911 = vmatprep.subr.mxu0 0.0
    %912 = vmatpush1.msra.mxu0 0.0
    %913 = vmatprep.subr.mxu0 0.0
    %914 = vmatpush1.msra.mxu0 0.0
    %915 = vmatprep.subr.mxu0 0.0
    %916 = vmatpush1.msra.mxu0 0.0
    %917 = vmatprep.subr.mxu0 0.0
    %918 = vmatpush1.msra.mxu0 0.0
    %919 = vmatprep.subr.mxu0 0.0
    %920 = vmatpush1.msra.mxu0 0.0
    %921 = vmatprep.subr.mxu0 0.0
    %922 = vmatpush1.msra.mxu0 0.0
    %923 = vmatprep.subr.mxu0 0.0
    %924 = vmatpush1.msra.mxu0 0.0
    %925 = vmatprep.subr.mxu0 0.0
    %926 = vmatpush1.msra.mxu0 0.0
    %927 = vmatprep.subr.mxu0 0.0
    %928 = vmatpush1.msra.mxu0 0.0
    %929 = vmatprep.subr.mxu0 0.0
    %930 = vmatpush1.msra.mxu0 0.0
    %931 = vmatprep.subr.mxu0 0.0
    %932 = vmatpush1.msra.mxu0 0.0
    %933 = vmatprep.subr.mxu0 0.0
    %934 = vmatpush1.msra.mxu0 0.0
    %935 = vmatprep.subr.mxu0 0.0
    %936 = vmatpush1.msra.mxu0 0.0
    %937 = vmatprep.subr.mxu0 0.0
    %938 = vmatpush1.msra.mxu0 0.0
    %939 = vmatprep.subr.mxu0 0.0
    %940 = vmatpush1.msra.mxu0 0.0
    %941 = vmatprep.subr.mxu0 0.0
    %942 = vmatpush1.msra.mxu0 0.0
    %943 = vmatprep.subr.mxu0 0.0
    %944 = vmatpush1.msra.mxu0 0.0
    %945 = vmatprep.subr.mxu0 0.0
    %946 = vmatpush1.msra.mxu0 0.0
    %947 = vmatprep.subr.mxu0 0.0
    %948 = vmatpush1.msra.mxu0 0.0
    %949 = vmatprep.subr.mxu0 0.0
    %950 = vmatpush1.msra.mxu0 0.0
    %951 = vmatprep.subr.mxu0 0.0
    %952 = vmatpush1.msra.mxu0 0.0
    %953 = vmatprep.mubr.f32.mxu0 0.0
    %954 = vmatmul.mubr.f32.gmra.mrb[0].mxu0 %v517
    %v955 = vpop.f32.mrb[0].mxu0
    %v956 = vadd.f32 %v499, %v955
    %v957 = vpop.f32.mrb[0].mxu0
    %958 = vmatprep.mubr.f32.mxu0 0.0
    %959 = vmatmul.mubr.f32.gmra.mrb[0].mxu0 %v520
    %v960 = vpop.f32.mrb[0].mxu0
    %v961 = vadd.f32 %v504, %v960
    %v962 = vpop.f32.mrb[0].mxu0
    %963 = vmatprep.mubr.f32.mxu0 0.0
    %964 = vmatmul.mubr.f32.gmra.mrb[0].mxu0 %v523
    %v965 = vpop.f32.mrb[0].mxu0
    %v966 = vadd.f32 %v509, %v965
    %v967 = vpop.f32.mrb[0].mxu0
    %968 = vmatprep.mubr.f32.mxu0 0.0
    %969 = vmatmul.mubr.f32.gmra.mrb[0].mxu0 %v526
    %v970 = vpop.f32.mrb[0].mxu0
    %v971 = vadd.f32 %v514, %v970
    %v972 = vpop.f32.mrb[0].mxu0
    %973 = vdwg.mxu0
    %v974 = vtanh.pop %v956
    %v975 = vtanh.pop %v961
    %v976 = vtanh.pop %v966
    %v977 = vtanh.pop %v971
    %v978 = vadd.f32 %v885, %v974
    %v979 = vadd.f32 %v886, %v975
    %v980 = vadd.f32 %v887, %v976
    %v981 = vadd.f32 %v888, %v977
    %982 = vmatprep.subr.mxu0 0.0
    %983 = vmatpush1.msra.mxu0 %v978
    %984 = vmatprep.subr.mxu0 0.0
    %985 = vmatpush1.msra.mxu0 %v979
    %986 = vmatprep.subr.mxu0 0.0
    %987 = vmatpush1.msra.mxu0 %v980
    %988 = vmatprep.subr.mxu0 0.0
    %989 = vmatpush1.msra.mxu0 %v981
    %990 = vmatprep.subr.mxu0 0.0
    %991 = vmatpush1.msra.mxu0 0.0
    %992 = vmatprep.subr.mxu0 0.0
    %993 = vmatpush1.msra.mxu0 0.0
    %994 = vmatprep.subr.mxu0 0.0
    %995 = vmatpush1.msra.mxu0 0.0
    %996 = vmatprep.subr.mxu0 0.0
    %997 = vmatpush1.msra.mxu0 0.0
    %998 = vmatprep.subr.mxu0 0.0
    %999 = vmatpush1.msra.mxu0 0.0
    %1000 = vmatprep.subr.mxu0 0.0
    %1001 = vmatpush1.msra.mxu0 0.0
    %1002 = vmatprep.subr.mxu0 0.0
    %1003 = vmatpush1.msra.mxu0 0.0
    %1004 = vmatprep.subr.mxu0 0.0
    %1005 = vmatpush1.msra.mxu0 0.0
    %1006 = vmatprep.subr.mxu0 0.0
    %1007 = vmatpush1.msra.mxu0 0.0
    %1008 = vmatprep.subr.mxu0 0.0
    %1009 = vmatpush1.msra.mxu0 0.0
    %1010 = vmatprep.subr.mxu0 0.0
    %1011 = vmatpush1.msra.mxu0 0.0
    %1012 = vmatprep.subr.mxu0 0.0
    %1013 = vmatpush1.msra.mxu0 0.0
    %1014 = vmatprep.subr.mxu0 0.0
    %1015 = vmatpush1.msra.mxu0 0.0
    %1016 = vmatprep.subr.mxu0 0.0
    %1017 = vmatpush1.msra.mxu0 0.0
    %1018 = vmatprep.subr.mxu0 0.0
    %1019 = vmatpush1.msra.mxu0 0.0
    %1020 = vmatprep.subr.mxu0 0.0
    %1021 = vmatpush1.msra.mxu0 0.0
    %1022 = vmatprep.subr.mxu0 0.0
    %1023 = vmatpush1.msra.mxu0 0.0
    %1024 = vmatprep.subr.mxu0 0.0
    %1025 = vmatpush1.msra.mxu0 0.0
    %1026 = vmatprep.subr.mxu0 0.0
    %1027 = vmatpush1.msra.mxu0 0.0
    %1028 = vmatprep.subr.mxu0 0.0
    %1029 = vmatpush1.msra.mxu0 0.0
    %1030 = vmatprep.subr.mxu0 0.0
    %1031 = vmatpush1.msra.mxu0 0.0
    %1032 = vmatprep.subr.mxu0 0.0
    %1033 = vmatpush1.msra.mxu0 0.0
    %1034 = vmatprep.subr.mxu0 0.0
    %1035 = vmatpush1.msra.mxu0 0.0
    %1036 = vmatprep.subr.mxu0 0.0
    %1037 = vmatpush1.msra.mxu0 0.0
    %1038 = vmatprep.subr.mxu0 0.0
    %1039 = vmatpush1.msra.mxu0 0.0
    %1040 = vmatprep.subr.mxu0 0.0
    %1041 = vmatpush1.msra.mxu0 0.0
    %1042 = vmatprep.subr.mxu0 0.0
    %1043 = vmatpush1.msra.mxu0 0.0
    %1044 = vmatprep.subr.mxu0 0.0
    %1045 = vmatpush1.msra.mxu0 0.0
    %1046 = vmatprep.mubr.f32.mxu0 0.0
    %1047 = vmatmul.mubr.f32.gmra.mrb[0].mxu0 %v627
    %v1048 = vpop.f32.mrb[0].mxu0
    %v1049 = vadd.f32 %v624, %v1048
    %v1050 = vpop.f32.mrb[0].mxu0
    %1051 = vdwg.mxu0
    %v1052 = vsub.f32 %v696, %v1049
    %v1053 = vadd.f32 %v45, %v1052
    %1054 = vst [vmem:[#allocation2] sm:$0xf] %v1053
    // Predicated region
    $region54: #{tpu_custom_call.1} parent=1 // pred_check
      _
    $region55: #{tpu_custom_call.1} parent=1 // pred_check_branch
      %1056 = sbr.rel (0) target = $region57
    $region56: #{tpu_custom_call.1} parent=1 // pred_region
      %s1058 = ssub.s32 64, 64
      %1059 = vsyncadd [#allocation3], %s1058
      %s1061 = sshll.u32 [#allocation2], 4
      %s1062 = int_to_ptr.vmem [resolvable:$true] %s1061
      %1064 = dma.vmem_to_hbm [thread:$0]  %s1062, 64, %s13, [#allocation3]
    $region57: #{tpu_custom_call.1} parent=1 // pred_fallthru
      _
    // Predicated region
    $region58: #{tpu_custom_call.1} parent=1 // pred_check
      _
    $region59: #{tpu_custom_call.1} parent=1 // pred_check_branch
      %1066 = sbr.rel (0) target = $region61
    $region60: #{tpu_custom_call.1} parent=1 // pred_region
      %1067 = dma.done [#allocation3], 64
    $region61: #{tpu_custom_call.1} parent=1 // pred_fallthru
      _
    %1068 = vsyncpa [#allocation3], 1

</llo_original>
